<compile_context>
chip_gen: v7x
topology: tpu7x:2x2x1
jax: 0.10.0
libtpu: 0.0.40
codegen_flags: <defaults>
</compile_context>

<pallas_src>
import jax
import jax.numpy as jnp
from jax.experimental import pallas as pl
from jax.experimental.pallas import tpu as pltpu

TILE_N = 2048          # lane tile over the batch (sweep 1024-4096)
OUT_ROWS = 8           # true out_dim (3) padded to one sublane group


def _round_up(v, m):
    return ((v + m - 1) // m) * m


def _make_pinn_kernel(n_hidden):
    """Kernel factory closed over the (static) number of hidden layers."""

    def kernel(x_ref, w_in_ref, b_in_ref, w_hid_ref, b_hid_ref,
               w_out_ref, b_out_ref, o_ref):
        # Feature-major: x_ref (2, tile_n), activations (H, tile_n).
        # --- First layer: K=2 done as a VPU FMA (too small for the MXU).
        w_in = w_in_ref[...]                       # (H, 2)
        h = jnp.tanh(
            w_in[:, 0:1] * x_ref[0:1, :]           # (H,1)*(1,tile_n)
            + w_in[:, 1:2] * x_ref[1:2, :]
            + b_in_ref[...]                        # (H, 1) broadcast over lanes
        )
        # --- Hidden layers (statically unrolled; switch to lax.fori_loop with
        #     dynamic w_hid_ref[l] indexing if n_hidden grows beyond ~4).
        for l in range(n_hidden):
            h = jnp.tanh(
                jnp.dot(w_hid_ref[l], h, preferred_element_type=jnp.float32)
                + b_hid_ref[l]                     # (H, 1)
            )
        # --- Output layer: (8, H) @ (H, tile_n) + b, lane-dense store.
        o_ref[...] = (
            jnp.dot(w_out_ref[...], h, preferred_element_type=jnp.float32)
            + b_out_ref[...]                       # (8, 1)
        ).astype(o_ref.dtype)

    return kernel


def pinn_forward(x, params):
    """x: (N, 2) float32. params: dict from init_pinn_params. Returns (N, 3)."""
    n = x.shape[0]
    H = params["w_in"].shape[1]
    L = params["w_hid"].shape[0]
    out_dim = params["w_out"].shape[1]

    # Feature-major operands (batch on the lane axis); transposes are tiny
    # (~20 B/sample) compared with the HBM writeback they eliminate.
    x_t = x.T                                        # (2, N)
    w_in_t = params["w_in"].T                        # (H, 2)
    b_in_t = params["b_in"].reshape(H, 1)            # (H, 1)
    if L > 0:
        w_hid_t = jnp.swapaxes(params["w_hid"], 1, 2)  # (L, H, H), per-layer W.T
        b_hid_t = jnp.swapaxes(params["b_hid"], 1, 2)  # (L, H, 1)
        l_spec = L
    else:
        # Guard hidden_layers == 0: pass unused dummies so specs are non-empty.
        w_hid_t = jnp.zeros((1, H, H), jnp.float32)
        b_hid_t = jnp.zeros((1, H, 1), jnp.float32)
        l_spec = 1
    # Zero-pad the output layer to OUT_ROWS rows (sublane-aligned M / store).
    w_out_t = jnp.pad(params["w_out"].T, ((0, OUT_ROWS - out_dim), (0, 0)))   # (8, H)
    b_out_t = jnp.pad(params["b_out"].reshape(out_dim, 1),
                      ((0, OUT_ROWS - out_dim), (0, 0)))                      # (8, 1)

    # Lane tile: multiple of 128, capped so there are >= 2 grid steps when n
    # allows (v7x megacore), and at TILE_N to bound VMEM.
    tile_n = min(TILE_N, max(128, _round_up(pl.cdiv(n, 2), 128)))
    grid = (pl.cdiv(n, tile_n),)

    cost = pl.CostEstimate(
        flops=2 * n * (2 * H + L * H * H + H * out_dim),
        transcendentals=n * H * (L + 1),
        bytes_accessed=4 * (n * 2 + n * out_dim
                            + 2 * H + H + L * H * H + L * H
                            + H * out_dim + out_dim),
    )

    out_t = pl.pallas_call(
        _make_pinn_kernel(L),
        out_shape=jax.ShapeDtypeStruct((OUT_ROWS, n), jnp.float32),
        grid=grid,
        in_specs=[
            pl.BlockSpec((2, tile_n), lambda i: (0, i)),          # x (feature-major)
            pl.BlockSpec((H, 2), lambda i: (0, 0)),               # w_in^T  (resident)
            pl.BlockSpec((H, 1), lambda i: (0, 0)),               # b_in^T
            pl.BlockSpec((l_spec, H, H), lambda i: (0, 0, 0)),    # w_hid^T
            pl.BlockSpec((l_spec, H, 1), lambda i: (0, 0, 0)),    # b_hid^T
            pl.BlockSpec((OUT_ROWS, H), lambda i: (0, 0)),        # w_out^T (8-padded)
            pl.BlockSpec((OUT_ROWS, 1), lambda i: (0, 0)),        # b_out^T (8-padded)
        ],
        out_specs=pl.BlockSpec((OUT_ROWS, tile_n), lambda i: (0, i)),
        compiler_params=pltpu.CompilerParams(
            dimension_semantics=("parallel",),
        ),
        cost_estimate=cost,
    )(
        x_t,
        w_in_t, b_in_t,
        w_hid_t, b_hid_t,
        w_out_t, b_out_t,
    )
    # (8, N) -> (N, 3): one small pass; XLA fuses the row-slice into the
    # transpose, so only ~12 B/sample are touched.
    return out_t[:out_dim, :].T


def init_pinn_params(key, hidden_layers, neurons_per_layer):
    """Deterministic init mimicking torch.nn.Linear (uniform +/- 1/sqrt(fan_in)).
    Weights stored as (in_features, out_features) so the reference does x @ W + b."""
    H = neurons_per_layer
    keys = jax.random.split(key, 6)

    def unif(k, shape, fan_in):
        bound = 1.0 / jnp.sqrt(jnp.float32(fan_in))
        return jax.random.uniform(k, shape, jnp.float32, -bound, bound)

    w_in = unif(keys[0], (2, H), 2)
    b_in = unif(keys[1], (1, H), 2)
    w_hid = unif(keys[2], (hidden_layers, H, H), H)
    b_hid = unif(keys[3], (hidden_layers, 1, H), H)
    w_out = unif(keys[4], (H, 3), H)
    b_out = unif(keys[5], (1, 3), H)
    return {"w_in": w_in, "b_in": b_in,
            "w_hid": w_hid, "b_hid": b_hid,
            "w_out": w_out, "b_out": b_out}


def pinn_reference(x, params):
    """Pure-JAX reference for correctness checking."""
    h = jnp.tanh(x @ params["w_in"] + params["b_in"])
    for l in range(params["w_hid"].shape[0]):
        h = jnp.tanh(h @ params["w_hid"][l] + params["b_hid"][l])
    return h @ params["w_out"] + params["b_out"]


if __name__ == "__main__":
    hidden_layers = 2
    neurons_per_layer = 32

    key = jax.random.PRNGKey(0)
    k_param, k_x1, k_x2 = jax.random.split(key, 3)
    params = init_pinn_params(k_param, hidden_layers, neurons_per_layer)

    # Small batch (single grid step, heavily ragged lane tile).
    x_small = jax.random.normal(k_x1, (8, 2), jnp.float32)
    out_small = jax.block_until_ready(pinn_forward(x_small, params))
    ref_small = pinn_reference(x_small, params)
    assert out_small.shape == (8, 3), out_small.shape
    assert jnp.allclose(out_small, ref_small, atol=1e-5, rtol=1e-5), \
        f"max err {jnp.max(jnp.abs(out_small - ref_small))}"

    # Larger batch (2 grid steps + ragged last block) to exercise the pipeline.
    x_big = jax.random.normal(k_x2, (300, 2), jnp.float32)
    out_big = jax.block_until_ready(pinn_forward(x_big, params))
    ref_big = pinn_reference(x_big, params)
    assert out_big.shape == (300, 3), out_big.shape
    assert jnp.allclose(out_big, ref_big, atol=1e-5, rtol=1e-5), \
        f"max err {jnp.max(jnp.abs(out_big - ref_big))}"

    print("KERNEL_OK")
</pallas_src>

<mosaic_0001>
module attributes {stable_mosaic.version = 11 : i64} {
  func.func @kernel(%arg0: i32, %arg1: memref<2x128xf32, #tpu.memory_space<vmem>>, %arg2: memref<32x2xf32, #tpu.memory_space<vmem>>, %arg3: memref<32x1xf32, #tpu.memory_space<vmem>>, %arg4: memref<2x32x32xf32, #tpu.memory_space<vmem>>, %arg5: memref<2x32x1xf32, #tpu.memory_space<vmem>>, %arg6: memref<8x32xf32, #tpu.memory_space<vmem>>, %arg7: memref<8x1xf32, #tpu.memory_space<vmem>>, %arg8: memref<8x128xf32, #tpu.memory_space<vmem>>) attributes {dimension_semantics = [#tpu.dimension_semantics<parallel>], iteration_bounds = array<i64: 1>, scalar_prefetch = 0 : i64, scratch_operands = 0 : i64, tpu.core_type = #tpu.core_type<tc>, window_params = [{transform_indices = @transform_0, window_bounds = array<i64: 2, 128>}, {pipeline_mode = #tpu.pipeline_mode<synchronous>, transform_indices = @transform_1, window_bounds = array<i64: 32, 2>}, {pipeline_mode = #tpu.pipeline_mode<synchronous>, transform_indices = @transform_2, window_bounds = array<i64: 32, 1>}, {pipeline_mode = #tpu.pipeline_mode<synchronous>, transform_indices = @transform_3, window_bounds = array<i64: 2, 32, 32>}, {pipeline_mode = #tpu.pipeline_mode<synchronous>, transform_indices = @transform_4, window_bounds = array<i64: 2, 32, 1>}, {pipeline_mode = #tpu.pipeline_mode<synchronous>, transform_indices = @transform_5, window_bounds = array<i64: 8, 32>}, {pipeline_mode = #tpu.pipeline_mode<synchronous>, transform_indices = @transform_6, window_bounds = array<i64: 8, 1>}, {transform_indices = @transform_7, window_bounds = array<i64: 8, 128>}]} {
    %c0 = arith.constant 0 : index
    %c0_0 = arith.constant 0 : index
    %0 = vector.load %arg2[%c0, %c0_0] : memref<32x2xf32, #tpu.memory_space<vmem>>, vector<32x2xf32>
    %1 = vector.extract_strided_slice %0 {offsets = [0, 0], sizes = [32, 1], strides = [1, 1]} : vector<32x2xf32> to vector<32x1xf32>
    %c0_1 = arith.constant 0 : index
    %c0_2 = arith.constant 0 : index
    %2 = vector.load %arg1[%c0_1, %c0_2] : memref<2x128xf32, #tpu.memory_space<vmem>>, vector<1x128xf32>
    %3 = vector.broadcast %1 : vector<32x1xf32> to vector<32x128xf32>
    %4 = vector.broadcast %2 : vector<1x128xf32> to vector<32x128xf32>
    %5 = arith.mulf %3, %4 : vector<32x128xf32>
    %6 = vector.extract_strided_slice %0 {offsets = [0, 1], sizes = [32, 1], strides = [1, 1]} : vector<32x2xf32> to vector<32x1xf32>
    %c1 = arith.constant 1 : index
    %c0_3 = arith.constant 0 : index
    %7 = vector.load %arg1[%c1, %c0_3] : memref<2x128xf32, #tpu.memory_space<vmem>>, vector<1x128xf32>
    %8 = vector.broadcast %6 : vector<32x1xf32> to vector<32x128xf32>
    %9 = vector.broadcast %7 : vector<1x128xf32> to vector<32x128xf32>
    %10 = arith.mulf %8, %9 : vector<32x128xf32>
    %11 = arith.addf %5, %10 : vector<32x128xf32>
    %c0_4 = arith.constant 0 : index
    %c0_5 = arith.constant 0 : index
    %12 = vector.load %arg3[%c0_4, %c0_5] : memref<32x1xf32, #tpu.memory_space<vmem>>, vector<32x1xf32>
    %13 = vector.broadcast %12 : vector<32x1xf32> to vector<32x128xf32>
    %14 = arith.addf %11, %13 : vector<32x128xf32>
    %15 = math.tanh %14 : vector<32x128xf32>
    %c0_6 = arith.constant 0 : index
    %c0_7 = arith.constant 0 : index
    %c0_8 = arith.constant 0 : index
    %16 = vector.load %arg4[%c0_6, %c0_7, %c0_8] : memref<2x32x32xf32, #tpu.memory_space<vmem>>, vector<1x32x32xf32>
    %17 = vector.shape_cast %16 : vector<1x32x32xf32> to vector<32x32xf32>
    %cst = arith.constant dense<0.000000e+00> : vector<32x128xf32>
    %18 = tpu.matmul %17, %15, %cst {dimension_numbers = #tpu.dot_dimension_numbers<[1], [0], [0], [1], [0, 0, 1, 1], [], []>} : vector<32x32xf32>, vector<32x128xf32>, vector<32x128xf32> -> vector<32x128xf32>
    %c0_9 = arith.constant 0 : index
    %c0_10 = arith.constant 0 : index
    %c0_11 = arith.constant 0 : index
    %19 = vector.load %arg5[%c0_9, %c0_10, %c0_11] : memref<2x32x1xf32, #tpu.memory_space<vmem>>, vector<1x32x1xf32>
    %20 = vector.shape_cast %19 : vector<1x32x1xf32> to vector<32x1xf32>
    %21 = vector.broadcast %20 : vector<32x1xf32> to vector<32x128xf32>
    %22 = arith.addf %18, %21 : vector<32x128xf32>
    %23 = math.tanh %22 : vector<32x128xf32>
    %c1_12 = arith.constant 1 : index
    %c0_13 = arith.constant 0 : index
    %c0_14 = arith.constant 0 : index
    %24 = vector.load %arg4[%c1_12, %c0_13, %c0_14] : memref<2x32x32xf32, #tpu.memory_space<vmem>>, vector<1x32x32xf32>
    %25 = vector.shape_cast %24 : vector<1x32x32xf32> to vector<32x32xf32>
    %cst_15 = arith.constant dense<0.000000e+00> : vector<32x128xf32>
    %26 = tpu.matmul %25, %23, %cst_15 {dimension_numbers = #tpu.dot_dimension_numbers<[1], [0], [0], [1], [0, 0, 1, 1], [], []>} : vector<32x32xf32>, vector<32x128xf32>, vector<32x128xf32> -> vector<32x128xf32>
    %c1_16 = arith.constant 1 : index
    %c0_17 = arith.constant 0 : index
    %c0_18 = arith.constant 0 : index
    %27 = vector.load %arg5[%c1_16, %c0_17, %c0_18] : memref<2x32x1xf32, #tpu.memory_space<vmem>>, vector<1x32x1xf32>
    %28 = vector.shape_cast %27 : vector<1x32x1xf32> to vector<32x1xf32>
    %29 = vector.broadcast %28 : vector<32x1xf32> to vector<32x128xf32>
    %30 = arith.addf %26, %29 : vector<32x128xf32>
    %31 = math.tanh %30 : vector<32x128xf32>
    %c0_19 = arith.constant 0 : index
    %c0_20 = arith.constant 0 : index
    %32 = vector.load %arg6[%c0_19, %c0_20] : memref<8x32xf32, #tpu.memory_space<vmem>>, vector<8x32xf32>
    %cst_21 = arith.constant dense<0.000000e+00> : vector<8x128xf32>
    %33 = tpu.matmul %32, %31, %cst_21 {dimension_numbers = #tpu.dot_dimension_numbers<[1], [0], [0], [1], [0, 0, 1, 1], [], []>} : vector<8x32xf32>, vector<32x128xf32>, vector<8x128xf32> -> vector<8x128xf32>
    %c0_22 = arith.constant 0 : index
    %c0_23 = arith.constant 0 : index
    %34 = vector.load %arg7[%c0_22, %c0_23] : memref<8x1xf32, #tpu.memory_space<vmem>>, vector<8x1xf32>
    %35 = vector.broadcast %34 : vector<8x1xf32> to vector<8x128xf32>
    %36 = arith.addf %33, %35 : vector<8x128xf32>
    %c0_24 = arith.constant 0 : index
    %c0_25 = arith.constant 0 : index
    %37 = vector.load %arg8[%c0_24, %c0_25] : memref<8x128xf32, #tpu.memory_space<vmem>>, vector<8x128xf32>
    tpu.vector_store %arg8[%c0_24, %c0_25], %36 {strides = array<i32>} : memref<8x128xf32, #tpu.memory_space<vmem>>, vector<8x128xf32>,
    return
  }
  func.func @transform_0(%arg0: i32) -> (i32, i32) {
    %c0_i32 = arith.constant 0 : i32
    %c0_i32_0 = arith.constant 0 : i32
    return %c0_i32, %arg0 : i32, i32
  }
  func.func @transform_1(%arg0: i32) -> (i32, i32) {
    %c0_i32 = arith.constant 0 : i32
    %c0_i32_0 = arith.constant 0 : i32
    %c0_i32_1 = arith.constant 0 : i32
    return %c0_i32, %c0_i32_0 : i32, i32
  }
  func.func @transform_2(%arg0: i32) -> (i32, i32) {
    %c0_i32 = arith.constant 0 : i32
    %c0_i32_0 = arith.constant 0 : i32
    %c0_i32_1 = arith.constant 0 : i32
    return %c0_i32, %c0_i32_0 : i32, i32
  }
  func.func @transform_3(%arg0: i32) -> (i32, i32, i32) {
    %c0_i32 = arith.constant 0 : i32
    %c0_i32_0 = arith.constant 0 : i32
    %c0_i32_1 = arith.constant 0 : i32
    %c0_i32_2 = arith.constant 0 : i32
    return %c0_i32, %c0_i32_0, %c0_i32_1 : i32, i32, i32
  }
  func.func @transform_4(%arg0: i32) -> (i32, i32, i32) {
    %c0_i32 = arith.constant 0 : i32
    %c0_i32_0 = arith.constant 0 : i32
    %c0_i32_1 = arith.constant 0 : i32
    %c0_i32_2 = arith.constant 0 : i32
    return %c0_i32, %c0_i32_0, %c0_i32_1 : i32, i32, i32
  }
  func.func @transform_5(%arg0: i32) -> (i32, i32) {
    %c0_i32 = arith.constant 0 : i32
    %c0_i32_0 = arith.constant 0 : i32
    %c0_i32_1 = arith.constant 0 : i32
    return %c0_i32, %c0_i32_0 : i32, i32
  }
  func.func @transform_6(%arg0: i32) -> (i32, i32) {
    %c0_i32 = arith.constant 0 : i32
    %c0_i32_0 = arith.constant 0 : i32
    %c0_i32_1 = arith.constant 0 : i32
    return %c0_i32, %c0_i32_0 : i32, i32
  }
  func.func @transform_7(%arg0: i32) -> (i32, i32) {
    %c0_i32 = arith.constant 0 : i32
    %c0_i32_0 = arith.constant 0 : i32
    return %c0_i32, %arg0 : i32, i32
  }
}

</mosaic_0001>

<llo_original>
// kernel: tpu_custom_call.1
$region0: #{tpu_custom_call.1}
  #allocation0 [shape = 'u32[]', space=smem, size = 0x4, offset = 0x4, fixed_abs, tag = 'smem constant byte address 0x4 - core index']
  #allocation1 [shape = 'u32[144,128]{1,0:T(1,128)}', space=vmem, size = 0x12000, scoped, tag = 'internal scratch']
  %s0 = inlined_call_operand.vmem [shape: f32[2,8], index: 0, kind: input, shape index: {}]
  %s1 = inlined_call_operand.vmem [shape: f32[32,2], index: 1, kind: input, shape index: {}]
  %s2 = inlined_call_operand.vmem [shape: f32[32,1], index: 2, kind: input, shape index: {}]
  %s3 = inlined_call_operand.vmem [shape: f32[2,32,32], index: 3, kind: input, shape index: {}]
  %s4 = inlined_call_operand.vmem [shape: f32[2,32,1], index: 4, kind: input, shape index: {}]
  %s5 = inlined_call_operand.vmem [shape: f32[8,32], index: 5, kind: input, shape index: {}]
  %s6 = inlined_call_operand.vmem [shape: f32[8,1], index: 6, kind: input, shape index: {}]
  %s7 = inlined_call_operand.hbm [shape: f32[8,8], index: 7, kind: output, shape index: {}]
  %s8 = sld [smem:[#allocation0]]
  $region38: #{tpu_custom_call.1} parent=0
    _
  %s10 = ssub.s32 1, %s8
  %s11 = scalar_select 0, %s10, %s8
  $region1: #{tpu_custom_call.1} parent=0
    #allocation2 [shape = 'u8[4096]{0}', space=vmem, size = 0x1000, scoped, tag = 'output window, operand 0, single buffered']
    #allocation3 [shape = 's32[1]{0}', space=sflag, size = 0x4, scoped, tag = 'scoped memory for tpu_custom_call.1']
    %12 = vsyncpa [#allocation3], 0
    // Predicated region
    $region2: #{tpu_custom_call.1} parent=1 // pred_check
      _
    $region3: #{tpu_custom_call.1} parent=1 // pred_check_branch
      %14 = sbr.rel (0) target = $region5
    $region4: #{tpu_custom_call.1} parent=1 // pred_region
      _
    $region5: #{tpu_custom_call.1} parent=1 // pred_fallthru
      _
    // Predicated region
    $region6: #{tpu_custom_call.1} parent=1 // pred_check
      _
    $region7: #{tpu_custom_call.1} parent=1 // pred_check_branch
      %16 = sbr.rel (0) target = $region9
    $region8: #{tpu_custom_call.1} parent=1 // pred_region
      _
    $region9: #{tpu_custom_call.1} parent=1 // pred_fallthru
      _
    // Predicated region
    $region10: #{tpu_custom_call.1} parent=1 // pred_check
      _
    $region11: #{tpu_custom_call.1} parent=1 // pred_check_branch
      %18 = sbr.rel (0) target = $region13
    $region12: #{tpu_custom_call.1} parent=1 // pred_region
      _
    $region13: #{tpu_custom_call.1} parent=1 // pred_fallthru
      _
    // Predicated region
    $region14: #{tpu_custom_call.1} parent=1 // pred_check
      _
    $region15: #{tpu_custom_call.1} parent=1 // pred_check_branch
      %20 = sbr.rel (0) target = $region17
    $region16: #{tpu_custom_call.1} parent=1 // pred_region
      _
    $region17: #{tpu_custom_call.1} parent=1 // pred_fallthru
      _
    // Predicated region
    $region18: #{tpu_custom_call.1} parent=1 // pred_check
      _
    $region19: #{tpu_custom_call.1} parent=1 // pred_check_branch
      %22 = sbr.rel (0) target = $region21
    $region20: #{tpu_custom_call.1} parent=1 // pred_region
      _
    $region21: #{tpu_custom_call.1} parent=1 // pred_fallthru
      _
    // Predicated region
    $region22: #{tpu_custom_call.1} parent=1 // pred_check
      _
    $region23: #{tpu_custom_call.1} parent=1 // pred_check_branch
      %24 = sbr.rel (0) target = $region25
    $region24: #{tpu_custom_call.1} parent=1 // pred_region
      _
    $region25: #{tpu_custom_call.1} parent=1 // pred_fallthru
      _
    // Predicated region
    $region26: #{tpu_custom_call.1} parent=1 // pred_check
      _
    $region27: #{tpu_custom_call.1} parent=1 // pred_check_branch
      %26 = sbr.rel (0) target = $region29
    $region28: #{tpu_custom_call.1} parent=1 // pred_region
      _
    $region29: #{tpu_custom_call.1} parent=1 // pred_fallthru
      _
    %v27 = vld [vmem:[%s1] sm:$0xff]
    %v28 = vld [vmem:[%s1 + $0x8] sm:$0xff]
    %v29 = vld [vmem:[%s1 + $0x10] sm:$0xff]
    %v30 = vld [vmem:[%s1 + $0x18] sm:$0xff]
    %v31 = vld [vmem:[%s0] sm:$0x1]
    %33 = vset.pattern.permute.xlu0 0
    %34 = vperm.xlu0 %33, %v27
    %v35 = vpop.permute.xlu0 %34
    %38 = vset.pattern.permute.xlu0 0
    %39 = vperm.xlu0 %38, %v28
    %v40 = vpop.permute.xlu0 %39
    %43 = vset.pattern.permute.xlu0 0
    %44 = vperm.xlu0 %43, %v29
    %v45 = vpop.permute.xlu0 %44
    %48 = vset.pattern.permute.xlu0 0
    %49 = vperm.xlu0 %48, %v30
    %v50 = vpop.permute.xlu0 %49
    %v52 = vlaneseq
    %v53 = vshrl.u32 %v52, 7
    %v54 = vsub.s32 0, %v53
    %v55 = vrot.slane %v31, %v54
    %v56 = vmul.f32 %v35, %v55
    %v57 = vmul.f32 %v40, %v55
    %v58 = vmul.f32 %v45, %v55
    %v59 = vmul.f32 %v50, %v55
    %v60 = vld [vmem:[%s0 + $0x1] sm:$0x1]
    %61 = vset.pattern.permute.xlu0 1
    %62 = vperm.xlu0 %61, %v27
    %v63 = vpop.permute.xlu0 %62
    %65 = vset.pattern.permute.xlu0 1
    %66 = vperm.xlu0 %65, %v28
    %v67 = vpop.permute.xlu0 %66
    %69 = vset.pattern.permute.xlu0 1
    %70 = vperm.xlu0 %69, %v29
    %v71 = vpop.permute.xlu0 %70
    %73 = vset.pattern.permute.xlu0 1
    %74 = vperm.xlu0 %73, %v30
    %v75 = vpop.permute.xlu0 %74
    %v77 = vlaneseq
    %v78 = vshrl.u32 %v77, 7
    %v79 = vsub.s32 0, %v78
    %v80 = vrot.slane %v60, %v79
    %v81 = vmul.f32 %v63, %v80
    %v82 = vmul.f32 %v67, %v80
    %v83 = vmul.f32 %v71, %v80
    %v84 = vmul.f32 %v75, %v80
    %v85 = vadd.f32 %v56, %v81
    %v86 = vadd.f32 %v57, %v82
    %v87 = vadd.f32 %v58, %v83
    %v88 = vadd.f32 %v59, %v84
    %v89 = vld [vmem:[%s2] sm:$0xff]
    %v90 = vld [vmem:[%s2 + $0x8] sm:$0xff]
    %v91 = vld [vmem:[%s2 + $0x10] sm:$0xff]
    %v92 = vld [vmem:[%s2 + $0x18] sm:$0xff]
    %94 = vset.pattern.permute.xlu0 0
    %95 = vperm.xlu0 %94, %v89
    %v96 = vpop.permute.xlu0 %95
    %99 = vset.pattern.permute.xlu0 0
    %100 = vperm.xlu0 %99, %v90
    %v101 = vpop.permute.xlu0 %100
    %104 = vset.pattern.permute.xlu0 0
    %105 = vperm.xlu0 %104, %v91
    %v106 = vpop.permute.xlu0 %105
    %109 = vset.pattern.permute.xlu0 0
    %110 = vperm.xlu0 %109, %v92
    %v111 = vpop.permute.xlu0 %110
    %v113 = vadd.f32 %v85, %v96
    %v114 = vadd.f32 %v86, %v101
    %v115 = vadd.f32 %v87, %v106
    %v116 = vadd.f32 %v88, %v111
    %v117 = vtanh.pop %v113
    %v118 = vtanh.pop %v114
    %v119 = vtanh.pop %v115
    %v120 = vtanh.pop %v116
    %v121 = vld [vmem:[%s3] sm:$0xff]
    %v122 = vld [vmem:[%s3 + $0x8] sm:$0xff]
    %v123 = vld [vmem:[%s3 + $0x10] sm:$0xff]
    %v124 = vld [vmem:[%s3 + $0x18] sm:$0xff]
    %v125 = vld [vmem:[%s4] sm:$0xff]
    %v126 = vld [vmem:[%s4 + $0x8] sm:$0xff]
    %v127 = vld [vmem:[%s4 + $0x10] sm:$0xff]
    %v128 = vld [vmem:[%s4 + $0x18] sm:$0xff]
    %130 = vset.pattern.permute.xlu0 0
    %131 = vperm.xlu0 %130, %v125
    %v132 = vpop.permute.xlu0 %131
    %135 = vset.pattern.permute.xlu0 0
    %136 = vperm.xlu0 %135, %v126
    %v137 = vpop.permute.xlu0 %136
    %140 = vset.pattern.permute.xlu0 0
    %141 = vperm.xlu0 %140, %v127
    %v142 = vpop.permute.xlu0 %141
    %145 = vset.pattern.permute.xlu0 0
    %146 = vperm.xlu0 %145, %v128
    %v147 = vpop.permute.xlu0 %146
    %vm149 = vcmask 261120
    %v151 = vsel %vm149, %v121, 0
    %v154 = vsel %vm149, %v122, 0
    %v157 = vsel %vm149, %v123, 0
    %v160 = vsel %vm149, %v124, 0
    %162 = vmatprep.subr.mxu0 0.0
    %163 = vmatpush1.msra.mxu0 %v117
    %164 = vmatprep.subr.mxu0 0.0
    %165 = vmatpush1.msra.mxu0 %v118
    %166 = vmatprep.subr.mxu0 0.0
    %167 = vmatpush1.msra.mxu0 %v119
    %168 = vmatprep.subr.mxu0 0.0
    %169 = vmatpush1.msra.mxu0 %v120
    %170 = vmatprep.subr.mxu0 0.0
    %171 = vmatpush1.msra.mxu0 0.0
    %172 = vmatprep.subr.mxu0 0.0
    %173 = vmatpush1.msra.mxu0 0.0
    %174 = vmatprep.subr.mxu0 0.0
    %175 = vmatpush1.msra.mxu0 0.0
    %176 = vmatprep.subr.mxu0 0.0
    %177 = vmatpush1.msra.mxu0 0.0
    %178 = vmatprep.subr.mxu0 0.0
    %179 = vmatpush1.msra.mxu0 0.0
    %180 = vmatprep.subr.mxu0 0.0
    %181 = vmatpush1.msra.mxu0 0.0
    %182 = vmatprep.subr.mxu0 0.0
    %183 = vmatpush1.msra.mxu0 0.0
    %184 = vmatprep.subr.mxu0 0.0
    %185 = vmatpush1.msra.mxu0 0.0
    %186 = vmatprep.subr.mxu0 0.0
    %187 = vmatpush1.msra.mxu0 0.0
    %188 = vmatprep.subr.mxu0 0.0
    %189 = vmatpush1.msra.mxu0 0.0
    %190 = vmatprep.subr.mxu0 0.0
    %191 = vmatpush1.msra.mxu0 0.0
    %192 = vmatprep.subr.mxu0 0.0
    %193 = vmatpush1.msra.mxu0 0.0
    %194 = vmatprep.subr.mxu0 0.0
    %195 = vmatpush1.msra.mxu0 0.0
    %196 = vmatprep.subr.mxu0 0.0
    %197 = vmatpush1.msra.mxu0 0.0
    %198 = vmatprep.subr.mxu0 0.0
    %199 = vmatpush1.msra.mxu0 0.0
    %200 = vmatprep.subr.mxu0 0.0
    %201 = vmatpush1.msra.mxu0 0.0
    %202 = vmatprep.subr.mxu0 0.0
    %203 = vmatpush1.msra.mxu0 0.0
    %204 = vmatprep.subr.mxu0 0.0
    %205 = vmatpush1.msra.mxu0 0.0
    %206 = vmatprep.subr.mxu0 0.0
    %207 = vmatpush1.msra.mxu0 0.0
    %208 = vmatprep.subr.mxu0 0.0
    %209 = vmatpush1.msra.mxu0 0.0
    %210 = vmatprep.subr.mxu0 0.0
    %211 = vmatpush1.msra.mxu0 0.0
    %212 = vmatprep.subr.mxu0 0.0
    %213 = vmatpush1.msra.mxu0 0.0
    %214 = vmatprep.subr.mxu0 0.0
    %215 = vmatpush1.msra.mxu0 0.0
    %216 = vmatprep.subr.mxu0 0.0
    %217 = vmatpush1.msra.mxu0 0.0
    %218 = vmatprep.subr.mxu0 0.0
    %219 = vmatpush1.msra.mxu0 0.0
    %220 = vmatprep.subr.mxu0 0.0
    %221 = vmatpush1.msra.mxu0 0.0
    %222 = vmatprep.subr.mxu0 0.0
    %223 = vmatpush1.msra.mxu0 0.0
    %224 = vmatprep.subr.mxu0 0.0
    %225 = vmatpush1.msra.mxu0 0.0
    %226 = vmatprep.mubr.f32.mxu0 0.0
    %227 = vmatmul.mubr.f32.gmra.mrb[0].mxu0 %v151
    %v228 = vpop.f32.mrb[0].mxu0
    %v229 = vadd.f32 %v132, %v228
    %v230 = vpop.f32.mrb[0].mxu0
    %231 = vmatprep.mubr.f32.mxu0 0.0
    %232 = vmatmul.mubr.f32.gmra.mrb[0].mxu0 %v154
    %v233 = vpop.f32.mrb[0].mxu0
    %v234 = vadd.f32 %v137, %v233
    %v235 = vpop.f32.mrb[0].mxu0
    %236 = vmatprep.mubr.f32.mxu0 0.0
    %237 = vmatmul.mubr.f32.gmra.mrb[0].mxu0 %v157
    %v238 = vpop.f32.mrb[0].mxu0
    %v239 = vadd.f32 %v142, %v238
    %v240 = vpop.f32.mrb[0].mxu0
    %241 = vmatprep.mubr.f32.mxu0 0.0
    %242 = vmatmul.mubr.f32.gmra.mrb[0].mxu0 %v160
    %v243 = vpop.f32.mrb[0].mxu0
    %v244 = vadd.f32 %v147, %v243
    %v245 = vpop.f32.mrb[0].mxu0
    %246 = vdwg.mxu0
    %v247 = vtanh.pop %v229
    %v248 = vtanh.pop %v234
    %v249 = vtanh.pop %v239
    %v250 = vtanh.pop %v244
    %s251 = scalar_lea.vmem %s3, 32
    %v252 = vld [vmem:[%s251] sm:$0xff]
    %v253 = vld [vmem:[%s251 + $0x8] sm:$0xff]
    %v254 = vld [vmem:[%s251 + $0x10] sm:$0xff]
    %v255 = vld [vmem:[%s251 + $0x18] sm:$0xff]
    %s256 = scalar_lea.vmem %s4, 32
    %v257 = vld [vmem:[%s256] sm:$0xff]
    %v258 = vld [vmem:[%s256 + $0x8] sm:$0xff]
    %v259 = vld [vmem:[%s256 + $0x10] sm:$0xff]
    %v260 = vld [vmem:[%s256 + $0x18] sm:$0xff]
    %262 = vset.pattern.permute.xlu0 0
    %263 = vperm.xlu0 %262, %v257
    %v264 = vpop.permute.xlu0 %263
    %267 = vset.pattern.permute.xlu0 0
    %268 = vperm.xlu0 %267, %v258
    %v269 = vpop.permute.xlu0 %268
    %272 = vset.pattern.permute.xlu0 0
    %273 = vperm.xlu0 %272, %v259
    %v274 = vpop.permute.xlu0 %273
    %277 = vset.pattern.permute.xlu0 0
    %278 = vperm.xlu0 %277, %v260
    %v279 = vpop.permute.xlu0 %278
    %v282 = vsel %vm149, %v252, 0
    %v285 = vsel %vm149, %v253, 0
    %v288 = vsel %vm149, %v254, 0
    %v291 = vsel %vm149, %v255, 0
    %293 = vmatprep.subr.mxu0 0.0
    %294 = vmatpush1.msra.mxu0 %v247
    %295 = vmatprep.subr.mxu0 0.0
    %296 = vmatpush1.msra.mxu0 %v248
    %297 = vmatprep.subr.mxu0 0.0
    %298 = vmatpush1.msra.mxu0 %v249
    %299 = vmatprep.subr.mxu0 0.0
    %300 = vmatpush1.msra.mxu0 %v250
    %301 = vmatprep.subr.mxu0 0.0
    %302 = vmatpush1.msra.mxu0 0.0
    %303 = vmatprep.subr.mxu0 0.0
    %304 = vmatpush1.msra.mxu0 0.0
    %305 = vmatprep.subr.mxu0 0.0
    %306 = vmatpush1.msra.mxu0 0.0
    %307 = vmatprep.subr.mxu0 0.0
    %308 = vmatpush1.msra.mxu0 0.0
    %309 = vmatprep.subr.mxu0 0.0
    %310 = vmatpush1.msra.mxu0 0.0
    %311 = vmatprep.subr.mxu0 0.0
    %312 = vmatpush1.msra.mxu0 0.0
    %313 = vmatprep.subr.mxu0 0.0
    %314 = vmatpush1.msra.mxu0 0.0
    %315 = vmatprep.subr.mxu0 0.0
    %316 = vmatpush1.msra.mxu0 0.0
    %317 = vmatprep.subr.mxu0 0.0
    %318 = vmatpush1.msra.mxu0 0.0
    %319 = vmatprep.subr.mxu0 0.0
    %320 = vmatpush1.msra.mxu0 0.0
    %321 = vmatprep.subr.mxu0 0.0
    %322 = vmatpush1.msra.mxu0 0.0
    %323 = vmatprep.subr.mxu0 0.0
    %324 = vmatpush1.msra.mxu0 0.0
    %325 = vmatprep.subr.mxu0 0.0
    %326 = vmatpush1.msra.mxu0 0.0
    %327 = vmatprep.subr.mxu0 0.0
    %328 = vmatpush1.msra.mxu0 0.0
    %329 = vmatprep.subr.mxu0 0.0
    %330 = vmatpush1.msra.mxu0 0.0
    %331 = vmatprep.subr.mxu0 0.0
    %332 = vmatpush1.msra.mxu0 0.0
    %333 = vmatprep.subr.mxu0 0.0
    %334 = vmatpush1.msra.mxu0 0.0
    %335 = vmatprep.subr.mxu0 0.0
    %336 = vmatpush1.msra.mxu0 0.0
    %337 = vmatprep.subr.mxu0 0.0
    %338 = vmatpush1.msra.mxu0 0.0
    %339 = vmatprep.subr.mxu0 0.0
    %340 = vmatpush1.msra.mxu0 0.0
    %341 = vmatprep.subr.mxu0 0.0
    %342 = vmatpush1.msra.mxu0 0.0
    %343 = vmatprep.subr.mxu0 0.0
    %344 = vmatpush1.msra.mxu0 0.0
    %345 = vmatprep.subr.mxu0 0.0
    %346 = vmatpush1.msra.mxu0 0.0
    %347 = vmatprep.subr.mxu0 0.0
    %348 = vmatpush1.msra.mxu0 0.0
    %349 = vmatprep.subr.mxu0 0.0
    %350 = vmatpush1.msra.mxu0 0.0
    %351 = vmatprep.subr.mxu0 0.0
    %352 = vmatpush1.msra.mxu0 0.0
    %353 = vmatprep.subr.mxu0 0.0
    %354 = vmatpush1.msra.mxu0 0.0
    %355 = vmatprep.subr.mxu0 0.0
    %356 = vmatpush1.msra.mxu0 0.0
    %357 = vmatprep.mubr.f32.mxu0 0.0
    %358 = vmatmul.mubr.f32.gmra.mrb[0].mxu0 %v282
    %v359 = vpop.f32.mrb[0].mxu0
    %v360 = vadd.f32 %v264, %v359
    %v361 = vpop.f32.mrb[0].mxu0
    %362 = vmatprep.mubr.f32.mxu0 0.0
    %363 = vmatmul.mubr.f32.gmra.mrb[0].mxu0 %v285
    %v364 = vpop.f32.mrb[0].mxu0
    %v365 = vadd.f32 %v269, %v364
    %v366 = vpop.f32.mrb[0].mxu0
    %367 = vmatprep.mubr.f32.mxu0 0.0
    %368 = vmatmul.mubr.f32.gmra.mrb[0].mxu0 %v288
    %v369 = vpop.f32.mrb[0].mxu0
    %v370 = vadd.f32 %v274, %v369
    %v371 = vpop.f32.mrb[0].mxu0
    %372 = vmatprep.mubr.f32.mxu0 0.0
    %373 = vmatmul.mubr.f32.gmra.mrb[0].mxu0 %v291
    %v374 = vpop.f32.mrb[0].mxu0
    %v375 = vadd.f32 %v279, %v374
    %v376 = vpop.f32.mrb[0].mxu0
    %377 = vdwg.mxu0
    %v378 = vtanh.pop %v360
    %v379 = vtanh.pop %v365
    %v380 = vtanh.pop %v370
    %v381 = vtanh.pop %v375
    %v382 = vld [vmem:[%s5] sm:$0xff]
    %v383 = vld [vmem:[%s6] sm:$0xff]
    %385 = vset.pattern.permute.xlu0 0
    %386 = vperm.xlu0 %385, %v383
    %v387 = vpop.permute.xlu0 %386
    %v390 = vsel %vm149, %v382, 0
    %392 = vmatprep.subr.mxu0 0.0
    %393 = vmatpush1.msra.mxu0 %v378
    %394 = vmatprep.subr.mxu0 0.0
    %395 = vmatpush1.msra.mxu0 %v379
    %396 = vmatprep.subr.mxu0 0.0
    %397 = vmatpush1.msra.mxu0 %v380
    %398 = vmatprep.subr.mxu0 0.0
    %399 = vmatpush1.msra.mxu0 %v381
    %400 = vmatprep.subr.mxu0 0.0
    %401 = vmatpush1.msra.mxu0 0.0
    %402 = vmatprep.subr.mxu0 0.0
    %403 = vmatpush1.msra.mxu0 0.0
    %404 = vmatprep.subr.mxu0 0.0
    %405 = vmatpush1.msra.mxu0 0.0
    %406 = vmatprep.subr.mxu0 0.0
    %407 = vmatpush1.msra.mxu0 0.0
    %408 = vmatprep.subr.mxu0 0.0
    %409 = vmatpush1.msra.mxu0 0.0
    %410 = vmatprep.subr.mxu0 0.0
    %411 = vmatpush1.msra.mxu0 0.0
    %412 = vmatprep.subr.mxu0 0.0
    %413 = vmatpush1.msra.mxu0 0.0
    %414 = vmatprep.subr.mxu0 0.0
    %415 = vmatpush1.msra.mxu0 0.0
    %416 = vmatprep.subr.mxu0 0.0
    %417 = vmatpush1.msra.mxu0 0.0
    %418 = vmatprep.subr.mxu0 0.0
    %419 = vmatpush1.msra.mxu0 0.0
    %420 = vmatprep.subr.mxu0 0.0
    %421 = vmatpush1.msra.mxu0 0.0
    %422 = vmatprep.subr.mxu0 0.0
    %423 = vmatpush1.msra.mxu0 0.0
    %424 = vmatprep.subr.mxu0 0.0
    %425 = vmatpush1.msra.mxu0 0.0
    %426 = vmatprep.subr.mxu0 0.0
    %427 = vmatpush1.msra.mxu0 0.0
    %428 = vmatprep.subr.mxu0 0.0
    %429 = vmatpush1.msra.mxu0 0.0
    %430 = vmatprep.subr.mxu0 0.0
    %431 = vmatpush1.msra.mxu0 0.0
    %432 = vmatprep.subr.mxu0 0.0
    %433 = vmatpush1.msra.mxu0 0.0
    %434 = vmatprep.subr.mxu0 0.0
    %435 = vmatpush1.msra.mxu0 0.0
    %436 = vmatprep.subr.mxu0 0.0
    %437 = vmatpush1.msra.mxu0 0.0
    %438 = vmatprep.subr.mxu0 0.0
    %439 = vmatpush1.msra.mxu0 0.0
    %440 = vmatprep.subr.mxu0 0.0
    %441 = vmatpush1.msra.mxu0 0.0
    %442 = vmatprep.subr.mxu0 0.0
    %443 = vmatpush1.msra.mxu0 0.0
    %444 = vmatprep.subr.mxu0 0.0
    %445 = vmatpush1.msra.mxu0 0.0
    %446 = vmatprep.subr.mxu0 0.0
    %447 = vmatpush1.msra.mxu0 0.0
    %448 = vmatprep.subr.mxu0 0.0
    %449 = vmatpush1.msra.mxu0 0.0
    %450 = vmatprep.subr.mxu0 0.0
    %451 = vmatpush1.msra.mxu0 0.0
    %452 = vmatprep.subr.mxu0 0.0
    %453 = vmatpush1.msra.mxu0 0.0
    %454 = vmatprep.subr.mxu0 0.0
    %455 = vmatpush1.msra.mxu0 0.0
    %456 = vmatprep.mubr.f32.mxu0 0.0
    %457 = vmatmul.mubr.f32.gmra.mrb[0].mxu0 %v390
    %v458 = vpop.f32.mrb[0].mxu0
    %v459 = vadd.f32 %v387, %v458
    %v460 = vpop.f32.mrb[0].mxu0
    %461 = vdwg.mxu0
    %462 = vst [vmem:[#allocation2] sm:$0xff] %v459
    // Predicated region
    $region30: #{tpu_custom_call.1} parent=1 // pred_check
      _
    $region31: #{tpu_custom_call.1} parent=1 // pred_check_branch
      %464 = sbr.rel (0) target = $region33
    $region32: #{tpu_custom_call.1} parent=1 // pred_region
      %s466 = ssub.s32 128, 128
      %467 = vsyncadd [#allocation3], %s466
      %s469 = sshll.u32 [#allocation2], 4
      %s470 = int_to_ptr.vmem [resolvable:$true] %s469
      %472 = dma.vmem_to_hbm [thread:$0]  %s470, 128, %s7, [#allocation3]
    $region33: #{tpu_custom_call.1} parent=1 // pred_fallthru
      _
    // Predicated region
    $region34: #{tpu_custom_call.1} parent=1 // pred_check
      _
    $region35: #{tpu_custom_call.1} parent=1 // pred_check_branch
      %474 = sbr.rel (0) target = $region37
    $region36: #{tpu_custom_call.1} parent=1 // pred_region
      %475 = dma.done [#allocation3], 128
    $region37: #{tpu_custom_call.1} parent=1 // pred_fallthru
      _
    %476 = vsyncpa [#allocation3], 1

</llo_original>
